<compile_context>
chip_gen: v5e
topology: v5e:2x2
jax: 0.10.0
libtpu: 0.0.40
codegen_flags: <defaults>
</compile_context>

<pallas_src>
import jax
import jax.numpy as jnp
import numpy as np
from jax.experimental import pallas as pl
from jax.experimental.pallas import tpu as pltpu

# Small, deterministic hyperparameters consistent with MalConv.__init__
EMBD_DIM = 8          # fixed in the module
MAX_LEN = 64          # args.max_len
WINDOW_SIZE = 8       # args.window_size
STRIDE = 4            # args.stride
NUM_FILTERS = 32      # args.num_filters
NUM_CLASSES = 2       # args.num_classes
BATCH = 2             # args.batch_size
K = 1                 # self.k (AdaptiveMaxPool1d output size)

L_OUT = (MAX_LEN - WINDOW_SIZE) // STRIDE + 1    # conv output length = 15
L_PAD = MAX_LEN // STRIDE                        # 16 rows per batch (last is pad)
CHUNK = STRIDE * EMBD_DIM                        # 32-wide flattened stride chunk
KW = EMBD_DIM * WINDOW_SIZE                      # flattened patch width = 64
OUT_LANES = 128                                  # lane-dense output width
OUT_SUBLANES = 8                                 # sublane-aligned output rows

# In-kernel patch construction assumes each conv window spans exactly two
# consecutive STRIDE*EMBD_DIM chunks of the flattened embedding.
assert WINDOW_SIZE == 2 * STRIDE
assert MAX_LEN % STRIDE == 0
assert L_OUT == L_PAD - 1


def malconv_kernel(emb_ref, convw_ref, fc1w_ref, fc2w_ref, b_ref, mask_ref,
                   out_ref):
    # emb_ref:   (L_PAD, CHUNK) f32   row j = emb[b, j*STRIDE:(j+1)*STRIDE, :].flatten()
    # convw_ref: (KW, 2F)       bf16  [value filters | gate filters], rows ordered w*C + c
    # fc1w_ref:  (F, 128)       f32   fc1 weight (in, out), lanes >= F zero
    # fc2w_ref:  (128, 128)     f32   fc2 weight, rows >= F and lanes >= num_classes zero
    # b_ref:     (8, 128)       f32   row0 = conv biases (b1|b2), row1 = fc1_b, row2 = fc2_b
    # mask_ref:  (L_PAD, 1)     f32   1.0 for valid conv positions, 0.0 for the pad row
    # out_ref:   (8, 128)       f32   logits (replicated across sublanes) in lanes 0..1

    # --- in-kernel im2col: window l = chunks l and l+1 of the flat embedding ---
    view = emb_ref[...]                                          # (L_PAD, CHUNK)
    nxt = jnp.concatenate([view[1:], view[:1]], axis=0)          # row j -> chunk j+1 (last row wraps; masked below)
    patches = jnp.concatenate([view, nxt], axis=1)               # (L_PAD, KW); row l = emb[l*S : l*S+W, :].flatten()

    # --- fused value+gate Conv1d as one bf16 MXU matmul, f32 accumulation ---
    conv = jnp.dot(patches.astype(jnp.bfloat16), convw_ref[...],
                   preferred_element_type=jnp.float32)           # (L_PAD, 2F) f32
    conv = conv + b_ref[0:1, :2 * NUM_FILTERS]

    value = conv[:, :NUM_FILTERS]
    gate = conv[:, NUM_FILTERS:]
    gated = jnp.maximum(value, 0.0) * jax.nn.sigmoid(gate)       # (L_PAD, F) f32, >= 0

    # Zero the padded conv position (precomputed mask constant; gated >= 0, so
    # a 0 never changes the per-filter max).
    gated = gated * mask_ref[...]

    # AdaptiveMaxPool1d(1): max over the temporal axis; replicate to 8 rows so
    # the final store is a full, unmasked (8, 128) slab.
    pooled = jnp.max(gated, axis=0, keepdims=True)               # (1, F)
    pooled = jnp.broadcast_to(pooled, (OUT_SUBLANES, NUM_FILTERS))

    # fc_1 -> relu -> fc_2, lane-padded to 128 (padded lanes stay exactly 0, so
    # feeding the full 128-lane h into fc2's 128x128 weight is exact).
    h = jnp.dot(pooled, fc1w_ref[...],
                preferred_element_type=jnp.float32) + b_ref[1:2, :]
    h = jnp.maximum(h, 0.0)                                      # (8, 128)
    logits = jnp.dot(h, fc2w_ref[...],
                     preferred_element_type=jnp.float32) + b_ref[2:3, :]
    out_ref[...] = logits                                        # lane-dense store


def pack_params(params):
    """One-time packing of MalConv weights into kernel-friendly layouts.

    Note: fc weights here use the (in, out) convention (applied as x @ W).
    Real PyTorch nn.Linear weights are stored (out, in) and must be transposed
    before packing; Conv1d weights are (F, C, W) exactly as in PyTorch.
    """
    # Fused conv weight (KW, 2F): rows ordered w*C + c to match the in-kernel
    # patch flattening emb[l*S : l*S+W, :].flatten(); bf16 for the MXU.
    w1 = params["conv1_w"].transpose(2, 1, 0).reshape(KW, NUM_FILTERS)
    w2 = params["conv2_w"].transpose(2, 1, 0).reshape(KW, NUM_FILTERS)
    conv_w = jnp.concatenate([w1, w2], axis=1).astype(jnp.bfloat16)

    fc1_w = jnp.zeros((NUM_FILTERS, OUT_LANES), jnp.float32)
    fc1_w = fc1_w.at[:, :NUM_FILTERS].set(params["fc1_w"])
    fc2_w = jnp.zeros((OUT_LANES, OUT_LANES), jnp.float32)
    fc2_w = fc2_w.at[:NUM_FILTERS, :NUM_CLASSES].set(params["fc2_w"])

    biases = jnp.zeros((OUT_SUBLANES, OUT_LANES), jnp.float32)
    biases = biases.at[0, :NUM_FILTERS].set(params["conv1_b"])
    biases = biases.at[0, NUM_FILTERS:2 * NUM_FILTERS].set(params["conv2_b"])
    biases = biases.at[1, :NUM_FILTERS].set(params["fc1_b"])
    biases = biases.at[2, :NUM_CLASSES].set(params["fc2_b"])

    # Valid-conv-position mask (row L_PAD-1 is the pad row).
    mask = (jnp.arange(L_PAD) < L_OUT).astype(jnp.float32).reshape(L_PAD, 1)

    return {"embd": params["embd"], "conv_w": conv_w, "fc1_w": fc1_w,
            "fc2_w": fc2_w, "biases": biases, "mask": mask}


@jax.jit
def malconv_forward(x_bytes, packed):
    # Embedding lookup (nn.Embedding(257, 8, padding_idx=0)); the contiguous
    # reshape is free and exposes each batch row as L_PAD chunks of CHUNK
    # values from which the kernel rebuilds the conv windows.
    emb = jnp.take(packed["embd"], x_bytes, axis=0)              # (B, L, C) f32
    emb_view = emb.reshape(BATCH, L_PAD, CHUNK)                  # (B, 16, 32)

    out = pl.pallas_call(
        malconv_kernel,
        out_shape=jax.ShapeDtypeStruct((BATCH, OUT_SUBLANES, OUT_LANES),
                                       jnp.float32),
        grid=(BATCH,),
        in_specs=[
            pl.BlockSpec((None, L_PAD, CHUNK), lambda b: (b, 0, 0)),
            pl.BlockSpec((KW, 2 * NUM_FILTERS), lambda b: (0, 0)),
            pl.BlockSpec((NUM_FILTERS, OUT_LANES), lambda b: (0, 0)),
            pl.BlockSpec((OUT_LANES, OUT_LANES), lambda b: (0, 0)),
            pl.BlockSpec((OUT_SUBLANES, OUT_LANES), lambda b: (0, 0)),
            pl.BlockSpec((L_PAD, 1), lambda b: (0, 0)),
        ],
        out_specs=pl.BlockSpec((None, OUT_SUBLANES, OUT_LANES),
                               lambda b: (b, 0, 0)),
        compiler_params=pltpu.CompilerParams(
            dimension_semantics=("parallel",)),  # both TCs on v7x; harmless on v5e/v6e
    )(emb_view, packed["conv_w"], packed["fc1_w"], packed["fc2_w"],
      packed["biases"], packed["mask"])

    return out[:, 0, :NUM_CLASSES]                               # (B, num_classes)


def reference_forward(x_bytes, params):
    """Pure-JAX f32 reference (independent formulation via lax conv)."""
    emb = jnp.take(params["embd"], x_bytes, axis=0)              # (B, L, 8)
    xc = jnp.transpose(emb, (0, 2, 1))                           # (B, 8, L)  NCW

    def conv1d(x, w, b):
        y = jax.lax.conv_general_dilated(
            x, w, window_strides=(STRIDE,), padding="VALID",
            dimension_numbers=("NCH", "OIH", "NCH"))
        return y + b[None, :, None]

    c1 = jax.nn.relu(conv1d(xc, params["conv1_w"], params["conv1_b"]))
    c2 = jax.nn.sigmoid(conv1d(xc, params["conv2_w"], params["conv2_b"]))
    g = c1 * c2
    pooled = jnp.max(g, axis=-1)                                 # (B, F)
    h = jax.nn.relu(pooled @ params["fc1_w"] + params["fc1_b"])
    return h @ params["fc2_w"] + params["fc2_b"]


def init_params(key):
    ks = jax.random.split(key, 8)
    embd = 0.1 * jax.random.normal(ks[0], (257, EMBD_DIM), jnp.float32)
    embd = embd.at[0].set(0.0)                                   # padding_idx=0
    return {
        "embd": embd,
        "conv1_w": 0.1 * jax.random.normal(
            ks[1], (NUM_FILTERS, EMBD_DIM, WINDOW_SIZE), jnp.float32),
        "conv1_b": 0.1 * jax.random.normal(ks[2], (NUM_FILTERS,), jnp.float32),
        "conv2_w": 0.1 * jax.random.normal(
            ks[3], (NUM_FILTERS, EMBD_DIM, WINDOW_SIZE), jnp.float32),
        "conv2_b": 0.1 * jax.random.normal(ks[4], (NUM_FILTERS,), jnp.float32),
        "fc1_w": 0.1 * jax.random.normal(
            ks[5], (NUM_FILTERS * K, NUM_FILTERS * K), jnp.float32),
        "fc1_b": 0.1 * jax.random.normal(ks[6], (NUM_FILTERS * K,), jnp.float32),
        "fc2_w": 0.1 * jax.random.normal(
            ks[7], (NUM_FILTERS * K, NUM_CLASSES), jnp.float32),
        "fc2_b": jnp.zeros((NUM_CLASSES,), jnp.float32),
    }


if __name__ == "__main__":
    key = jax.random.PRNGKey(0)
    pkey, xkey = jax.random.split(key)
    params = init_params(pkey)
    packed = pack_params(params)          # one-time packing, hoisted out of forward

    # Byte sequence input (values 0..256), like MalConv's x.long()
    x = jax.random.randint(xkey, (BATCH, MAX_LEN), 0, 257, dtype=jnp.int32)

    out = jax.block_until_ready(malconv_forward(x, packed))
    ref = jax.block_until_ready(reference_forward(x, params))

    # Tolerance sized for bf16 conv-matmul operands (f32 accumulation); the
    # fc path and all elementwise math remain f32.
    np.testing.assert_allclose(np.asarray(out), np.asarray(ref),
                               rtol=1e-2, atol=1e-2)

    print("KERNEL_OK")
</pallas_src>

<mosaic_0001>
module attributes {stable_mosaic.version = 11 : i64} {
  func.func @malconv_kernel(%arg0: i32, %arg1: memref<1x16x32xf32, #tpu.memory_space<vmem>>, %arg2: memref<64x64xbf16, #tpu.memory_space<vmem>>, %arg3: memref<32x128xf32, #tpu.memory_space<vmem>>, %arg4: memref<128x128xf32, #tpu.memory_space<vmem>>, %arg5: memref<8x128xf32, #tpu.memory_space<vmem>>, %arg6: memref<16x1xf32, #tpu.memory_space<vmem>>, %arg7: memref<1x8x128xf32, #tpu.memory_space<vmem>>) attributes {dimension_semantics = [#tpu.dimension_semantics<parallel>], iteration_bounds = array<i64: 2>, scalar_prefetch = 0 : i64, scratch_operands = 0 : i64, tpu.core_type = #tpu.core_type<tc>, window_params = [{transform_indices = @transform_0, window_bounds = array<i64: 1, 16, 32>}, {pipeline_mode = #tpu.pipeline_mode<synchronous>, transform_indices = @transform_1, window_bounds = array<i64: 64, 64>}, {pipeline_mode = #tpu.pipeline_mode<synchronous>, transform_indices = @transform_2, window_bounds = array<i64: 32, 128>}, {pipeline_mode = #tpu.pipeline_mode<synchronous>, transform_indices = @transform_3, window_bounds = array<i64: 128, 128>}, {pipeline_mode = #tpu.pipeline_mode<synchronous>, transform_indices = @transform_4, window_bounds = array<i64: 8, 128>}, {pipeline_mode = #tpu.pipeline_mode<synchronous>, transform_indices = @transform_5, window_bounds = array<i64: 16, 1>}, {transform_indices = @transform_6, window_bounds = array<i64: 1, 8, 128>}]} {
    %c0 = arith.constant 0 : index
    %c0_0 = arith.constant 0 : index
    %c0_1 = arith.constant 0 : index
    %0 = vector.load %arg1[%c0, %c0_0, %c0_1] : memref<1x16x32xf32, #tpu.memory_space<vmem>>, vector<1x16x32xf32>
    %1 = vector.shape_cast %0 : vector<1x16x32xf32> to vector<16x32xf32>
    %2 = vector.extract_strided_slice %1 {offsets = [1, 0], sizes = [15, 32], strides = [1, 1]} : vector<16x32xf32> to vector<15x32xf32>
    %3 = vector.extract_strided_slice %1 {offsets = [0, 0], sizes = [1, 32], strides = [1, 1]} : vector<16x32xf32> to vector<1x32xf32>
    %4 = tpu.concatenate %2, %3 in 0 : vector<15x32xf32>, vector<1x32xf32> -> vector<16x32xf32>
    %5 = tpu.concatenate %1, %4 in 1 : vector<16x32xf32>, vector<16x32xf32> -> vector<16x64xf32>
    %6 = arith.truncf %5 : vector<16x64xf32> to vector<16x64xbf16>
    %c0_2 = arith.constant 0 : index
    %c0_3 = arith.constant 0 : index
    %7 = vector.load %arg2[%c0_2, %c0_3] : memref<64x64xbf16, #tpu.memory_space<vmem>>, vector<64x64xbf16>
    %cst = arith.constant dense<0.000000e+00> : vector<16x64xf32>
    %8 = tpu.matmul %6, %7, %cst {dimension_numbers = #tpu.dot_dimension_numbers<[1], [0], [0], [1], [0, 0, 1, 1], [], []>} : vector<16x64xbf16>, vector<64x64xbf16>, vector<16x64xf32> -> vector<16x64xf32>
    %c0_4 = arith.constant 0 : index
    %c0_5 = arith.constant 0 : index
    %9 = vector.load %arg5[%c0_4, %c0_5] : memref<8x128xf32, #tpu.memory_space<vmem>>, vector<1x64xf32>
    %10 = vector.broadcast %9 : vector<1x64xf32> to vector<16x64xf32>
    %11 = arith.addf %8, %10 : vector<16x64xf32>
    %12 = vector.extract_strided_slice %11 {offsets = [0, 0], sizes = [16, 32], strides = [1, 1]} : vector<16x64xf32> to vector<16x32xf32>
    %13 = vector.extract_strided_slice %11 {offsets = [0, 32], sizes = [16, 32], strides = [1, 1]} : vector<16x64xf32> to vector<16x32xf32>
    %cst_6 = arith.constant 0.000000e+00 : f32
    %14 = vector.broadcast %cst_6 : f32 to vector<16x32xf32>
    %15 = arith.maximumf %12, %14 : vector<16x32xf32>
    %16 = arith.negf %13 : vector<16x32xf32>
    %17 = math.exp %16 : vector<16x32xf32>
    %cst_7 = arith.constant 1.000000e+00 : f32
    %18 = vector.broadcast %cst_7 : f32 to vector<16x32xf32>
    %19 = arith.addf %18, %17 : vector<16x32xf32>
    %20 = arith.divf %18, %19 : vector<16x32xf32>
    %21 = arith.mulf %15, %20 : vector<16x32xf32>
    %c0_8 = arith.constant 0 : index
    %c0_9 = arith.constant 0 : index
    %22 = vector.load %arg6[%c0_8, %c0_9] : memref<16x1xf32, #tpu.memory_space<vmem>>, vector<16x1xf32>
    %23 = vector.broadcast %22 : vector<16x1xf32> to vector<16x32xf32>
    %24 = arith.mulf %21, %23 : vector<16x32xf32>
    %cst_10 = arith.constant dense<0xFF800000> : vector<32xf32>
    %25 = vector.multi_reduction <maximumf>, %24, %cst_10 [0] : vector<16x32xf32> to vector<32xf32>
    %26 = vector.shape_cast %25 : vector<32xf32> to vector<1x32xf32>
    %27 = vector.shape_cast %26 : vector<1x32xf32> to vector<1x32xf32>
    %28 = vector.broadcast %27 : vector<1x32xf32> to vector<8x32xf32>
    %c0_11 = arith.constant 0 : index
    %c0_12 = arith.constant 0 : index
    %29 = vector.load %arg3[%c0_11, %c0_12] : memref<32x128xf32, #tpu.memory_space<vmem>>, vector<32x128xf32>
    %cst_13 = arith.constant dense<0.000000e+00> : vector<8x128xf32>
    %30 = tpu.matmul %28, %29, %cst_13 {dimension_numbers = #tpu.dot_dimension_numbers<[1], [0], [0], [1], [0, 0, 1, 1], [], []>} : vector<8x32xf32>, vector<32x128xf32>, vector<8x128xf32> -> vector<8x128xf32>
    %c1 = arith.constant 1 : index
    %c0_14 = arith.constant 0 : index
    %31 = vector.load %arg5[%c1, %c0_14] : memref<8x128xf32, #tpu.memory_space<vmem>>, vector<1x128xf32>
    %32 = vector.broadcast %31 : vector<1x128xf32> to vector<8x128xf32>
    %33 = arith.addf %30, %32 : vector<8x128xf32>
    %cst_15 = arith.constant 0.000000e+00 : f32
    %34 = vector.broadcast %cst_15 : f32 to vector<8x128xf32>
    %35 = arith.maximumf %33, %34 : vector<8x128xf32>
    %c0_16 = arith.constant 0 : index
    %c0_17 = arith.constant 0 : index
    %36 = vector.load %arg4[%c0_16, %c0_17] : memref<128x128xf32, #tpu.memory_space<vmem>>, vector<128x128xf32>
    %cst_18 = arith.constant dense<0.000000e+00> : vector<8x128xf32>
    %37 = tpu.matmul %35, %36, %cst_18 {dimension_numbers = #tpu.dot_dimension_numbers<[1], [0], [0], [1], [0, 0, 1, 1], [], []>} : vector<8x128xf32>, vector<128x128xf32>, vector<8x128xf32> -> vector<8x128xf32>
    %c2 = arith.constant 2 : index
    %c0_19 = arith.constant 0 : index
    %38 = vector.load %arg5[%c2, %c0_19] : memref<8x128xf32, #tpu.memory_space<vmem>>, vector<1x128xf32>
    %39 = vector.broadcast %38 : vector<1x128xf32> to vector<8x128xf32>
    %40 = arith.addf %37, %39 : vector<8x128xf32>
    %c0_20 = arith.constant 0 : index
    %c0_21 = arith.constant 0 : index
    %c0_22 = arith.constant 0 : index
    %41 = vector.load %arg7[%c0_20, %c0_21, %c0_22] : memref<1x8x128xf32, #tpu.memory_space<vmem>>, vector<1x8x128xf32>
    %42 = vector.shape_cast %41 : vector<1x8x128xf32> to vector<8x128xf32>
    %43 = vector.shape_cast %40 : vector<8x128xf32> to vector<1x8x128xf32>
    tpu.vector_store %arg7[%c0_20, %c0_21, %c0_22], %43 {strides = array<i32>} : memref<1x8x128xf32, #tpu.memory_space<vmem>>, vector<1x8x128xf32>,
    return
  }
  func.func @transform_0(%arg0: i32) -> (i32, i32, i32) {
    %c0_i32 = arith.constant 0 : i32
    %c0_i32_0 = arith.constant 0 : i32
    %c0_i32_1 = arith.constant 0 : i32
    return %arg0, %c0_i32, %c0_i32_0 : i32, i32, i32
  }
  func.func @transform_1(%arg0: i32) -> (i32, i32) {
    %c0_i32 = arith.constant 0 : i32
    %c0_i32_0 = arith.constant 0 : i32
    %c0_i32_1 = arith.constant 0 : i32
    return %c0_i32, %c0_i32_0 : i32, i32
  }
  func.func @transform_2(%arg0: i32) -> (i32, i32) {
    %c0_i32 = arith.constant 0 : i32
    %c0_i32_0 = arith.constant 0 : i32
    %c0_i32_1 = arith.constant 0 : i32
    return %c0_i32, %c0_i32_0 : i32, i32
  }
  func.func @transform_3(%arg0: i32) -> (i32, i32) {
    %c0_i32 = arith.constant 0 : i32
    %c0_i32_0 = arith.constant 0 : i32
    %c0_i32_1 = arith.constant 0 : i32
    return %c0_i32, %c0_i32_0 : i32, i32
  }
  func.func @transform_4(%arg0: i32) -> (i32, i32) {
    %c0_i32 = arith.constant 0 : i32
    %c0_i32_0 = arith.constant 0 : i32
    %c0_i32_1 = arith.constant 0 : i32
    return %c0_i32, %c0_i32_0 : i32, i32
  }
  func.func @transform_5(%arg0: i32) -> (i32, i32) {
    %c0_i32 = arith.constant 0 : i32
    %c0_i32_0 = arith.constant 0 : i32
    %c0_i32_1 = arith.constant 0 : i32
    return %c0_i32, %c0_i32_0 : i32, i32
  }
  func.func @transform_6(%arg0: i32) -> (i32, i32, i32) {
    %c0_i32 = arith.constant 0 : i32
    %c0_i32_0 = arith.constant 0 : i32
    %c0_i32_1 = arith.constant 0 : i32
    return %arg0, %c0_i32, %c0_i32_0 : i32, i32, i32
  }
}

</mosaic_0001>

<llo_original>
// kernel: malconv_forward.1
$region0: #{malconv_forward.1}
  #allocation0 [shape = 'u32[]', space=smem, size = 0x4, offset = 0x4, fixed_abs, tag = 'smem constant byte address 0x4 - core index']
  #allocation1 [shape = 'u32[72,128]{1,0:T(1,128)}', space=vmem, size = 0x9000, scoped, tag = 'internal scratch']
  %s0 = inlined_call_operand.vmem [shape: f32[2,16,32], index: 0, kind: input, shape index: {}]
  %s1 = inlined_call_operand.vmem [shape: bf16[64,64], index: 1, kind: input, shape index: {}]
  %s2 = inlined_call_operand.vmem [shape: f32[32,128], index: 2, kind: input, shape index: {}]
  %s3 = inlined_call_operand.vmem [shape: f32[128,128], index: 3, kind: input, shape index: {}]
  %s4 = inlined_call_operand.vmem [shape: f32[8,128], index: 4, kind: input, shape index: {}]
  %s5 = inlined_call_operand.vmem [shape: f32[16,1], index: 5, kind: input, shape index: {}]
  %s6 = inlined_call_operand.vmem [shape: f32[2,8,128], index: 6, kind: output, shape index: {}]
  %s7 = sld [smem:[#allocation0]]
  $region57: #{malconv_forward.1} parent=0
    _
  %s9 = ssub.s32 1, %s7
  %s10 = scalar_select 0, %s9, %s7
  loop: start=0, step=1, limit=4
  $region2: #{malconv_forward.1} parent=0 // loop_pre_header
    _
  $region3: #{malconv_forward.1} parent=0 // loop_header
    %s12 = sphi 0, %s16
    %p13 = scmp.ge.s32.totalorder %s12, 4
    %s22 = sphi 0, %s24
    %s25 = sphi 0, %s22
    %s26 = sphi 0, %s25
    %s42 = sphi 0, %s26
    %s46 = sphi 0, %s46
    %s48 = sphi 0, %s46
    %s49 = sphi 0, %s48
    %s63 = sphi 0, %s49
    %s67 = sphi 0, %s67
    %s69 = sphi 0, %s67
    %s70 = sphi 0, %s69
    %s84 = sphi 0, %s70
    %s88 = sphi 0, %s88
    %s90 = sphi 0, %s88
    %s91 = sphi 0, %s90
    %s105 = sphi 0, %s91
    %s109 = sphi 0, %s109
    %s111 = sphi 0, %s109
    %s112 = sphi 0, %s111
    %s126 = sphi 0, %s112
    %s130 = sphi 0, %s130
    %s132 = sphi 0, %s130
    %s133 = sphi 0, %s132
    %s147 = sphi 0, %s133
    %s153 = sphi 0, %s155
    %s156 = sphi 0, %s153
    %s157 = sphi 0, %s156
    %s173 = sphi 0, %s157
  $region4: #{malconv_forward.1} parent=0 // loop_header_branch
    %15 = sbr.rel (%p13) target = $region8
  $region5: #{malconv_forward.1} parent=0 // loop_body
    %s17 = ssub.s32 %s12, 1
    %s18 = ssub.s32 %s12, 2
    %s19 = sadd.s32 %s12, 1
    %s20 = ssub.s32 %s12, %s19
    %p21 = scmp.eq.s32.totalorder %s20, 0
    %s23 = sadd.s32 %s22, 1
    %s24 = scalar_select %p21, %s22, %s23
    %p27 = pneg %p21
    %p28 = scmp.eq.s32.totalorder %s12, 1
    %p29 = por %p27, %p28
    %p30 = scmp.ne.s32.totalorder %s22, %s25
    %p31 = scmp.eq.s32.totalorder %s12, 0
    %p32 = por %p30, %p31
    %p33 = scmp.ne.s32.totalorder %s22, %s25
    %p34 = scmp.eq.s32.totalorder %s17, 1
    %p35 = por %p33, %p34
    %p36 = scmp.ne.s32.totalorder %s25, %s26
    %p37 = scmp.eq.s32.totalorder %s17, 0
    %p38 = por %p36, %p37
    %p39 = scmp.ne.s32.totalorder %s25, %s26
    %p40 = scmp.eq.s32.totalorder %s18, 1
    %p41 = por %p39, %p40
    %p43 = scmp.ne.s32.totalorder %s26, %s42
    %p44 = scmp.eq.s32.totalorder %s18, 0
    %p45 = por %p43, %p44
    %s47 = sadd.s32 %s46, 1
    %p50 = scmp.eq.s32.totalorder %s12, 1
    %p51 = scmp.ne.s32.totalorder %s46, %s48
    %p52 = scmp.eq.s32.totalorder %s12, 0
    %p53 = por %p51, %p52
    %p54 = scmp.ne.s32.totalorder %s46, %s48
    %p55 = scmp.eq.s32.totalorder %s17, 1
    %p56 = por %p54, %p55
    %p57 = scmp.ne.s32.totalorder %s48, %s49
    %p58 = scmp.eq.s32.totalorder %s17, 0
    %p59 = por %p57, %p58
    %p60 = scmp.ne.s32.totalorder %s48, %s49
    %p61 = scmp.eq.s32.totalorder %s18, 1
    %p62 = por %p60, %p61
    %p64 = scmp.ne.s32.totalorder %s49, %s63
    %p65 = scmp.eq.s32.totalorder %s18, 0
    %p66 = por %p64, %p65
    %s68 = sadd.s32 %s67, 1
    %p71 = scmp.eq.s32.totalorder %s12, 1
    %p72 = scmp.ne.s32.totalorder %s67, %s69
    %p73 = scmp.eq.s32.totalorder %s12, 0
    %p74 = por %p72, %p73
    %p75 = scmp.ne.s32.totalorder %s67, %s69
    %p76 = scmp.eq.s32.totalorder %s17, 1
    %p77 = por %p75, %p76
    %p78 = scmp.ne.s32.totalorder %s69, %s70
    %p79 = scmp.eq.s32.totalorder %s17, 0
    %p80 = por %p78, %p79
    %p81 = scmp.ne.s32.totalorder %s69, %s70
    %p82 = scmp.eq.s32.totalorder %s18, 1
    %p83 = por %p81, %p82
    %p85 = scmp.ne.s32.totalorder %s70, %s84
    %p86 = scmp.eq.s32.totalorder %s18, 0
    %p87 = por %p85, %p86
    %s89 = sadd.s32 %s88, 1
    %p92 = scmp.eq.s32.totalorder %s12, 1
    %p93 = scmp.ne.s32.totalorder %s88, %s90
    %p94 = scmp.eq.s32.totalorder %s12, 0
    %p95 = por %p93, %p94
    %p96 = scmp.ne.s32.totalorder %s88, %s90
    %p97 = scmp.eq.s32.totalorder %s17, 1
    %p98 = por %p96, %p97
    %p99 = scmp.ne.s32.totalorder %s90, %s91
    %p100 = scmp.eq.s32.totalorder %s17, 0
    %p101 = por %p99, %p100
    %p102 = scmp.ne.s32.totalorder %s90, %s91
    %p103 = scmp.eq.s32.totalorder %s18, 1
    %p104 = por %p102, %p103
    %p106 = scmp.ne.s32.totalorder %s91, %s105
    %p107 = scmp.eq.s32.totalorder %s18, 0
    %p108 = por %p106, %p107
    %s110 = sadd.s32 %s109, 1
    %p113 = scmp.eq.s32.totalorder %s12, 1
    %p114 = scmp.ne.s32.totalorder %s109, %s111
    %p115 = scmp.eq.s32.totalorder %s12, 0
    %p116 = por %p114, %p115
    %p117 = scmp.ne.s32.totalorder %s109, %s111
    %p118 = scmp.eq.s32.totalorder %s17, 1
    %p119 = por %p117, %p118
    %p120 = scmp.ne.s32.totalorder %s111, %s112
    %p121 = scmp.eq.s32.totalorder %s17, 0
    %p122 = por %p120, %p121
    %p123 = scmp.ne.s32.totalorder %s111, %s112
    %p124 = scmp.eq.s32.totalorder %s18, 1
    %p125 = por %p123, %p124
    %p127 = scmp.ne.s32.totalorder %s112, %s126
    %p128 = scmp.eq.s32.totalorder %s18, 0
    %p129 = por %p127, %p128
    %s131 = sadd.s32 %s130, 1
    %p134 = scmp.eq.s32.totalorder %s12, 1
    %p135 = scmp.ne.s32.totalorder %s130, %s132
    %p136 = scmp.eq.s32.totalorder %s12, 0
    %p137 = por %p135, %p136
    %p138 = scmp.ne.s32.totalorder %s130, %s132
    %p139 = scmp.eq.s32.totalorder %s17, 1
    %p140 = por %p138, %p139
    %p141 = scmp.ne.s32.totalorder %s132, %s133
    %p142 = scmp.eq.s32.totalorder %s17, 0
    %p143 = por %p141, %p142
    %p144 = scmp.ne.s32.totalorder %s132, %s133
    %p145 = scmp.eq.s32.totalorder %s18, 1
    %p146 = por %p144, %p145
    %p148 = scmp.ne.s32.totalorder %s133, %s147
    %p149 = scmp.eq.s32.totalorder %s18, 0
    %p150 = por %p148, %p149
    %s151 = ssub.s32 %s12, %s19
    %p152 = scmp.eq.s32.totalorder %s151, 0
    %s154 = sadd.s32 %s153, 1
    %s155 = scalar_select %p152, %s153, %s154
    %p158 = pneg %p152
    %p159 = scmp.eq.s32.totalorder %s12, 1
    %p160 = por %p158, %p159
    %p161 = scmp.ne.s32.totalorder %s153, %s156
    %p162 = scmp.eq.s32.totalorder %s12, 0
    %p163 = por %p161, %p162
    %p164 = scmp.ne.s32.totalorder %s153, %s156
    %p165 = scmp.eq.s32.totalorder %s17, 1
    %p166 = por %p164, %p165
    %p167 = scmp.ne.s32.totalorder %s156, %s157
    %p168 = scmp.eq.s32.totalorder %s17, 0
    %p169 = por %p167, %p168
    %p170 = scmp.ne.s32.totalorder %s156, %s157
    %p171 = scmp.eq.s32.totalorder %s18, 1
    %p172 = por %p170, %p171
    %p174 = scmp.ne.s32.totalorder %s157, %s173
    %p175 = scmp.eq.s32.totalorder %s18, 0
    %p176 = por %p174, %p175
    %p177 = scmp.le.s32.totalorder 1, %s12
    %p178 = scmp.lt.s32.totalorder %s12, 3
    %p179 = pnand %p177, %p178
    %p180 = pneg %p179
    // Predicated region
    $region9: #{malconv_forward.1} parent=5 // pred_check
      _
    $region10: #{malconv_forward.1} parent=5 // pred_check_branch
      %182 = sbr.rel (%p179) target = $region12
    $region11: #{malconv_forward.1} parent=5 // pred_region
      %s183 = ssub.s32 %s12, 1
      // Predicated region
      $region13: #{malconv_forward.1} parent=11 // pred_check
        %p184 = pneg %p59
      $region14: #{malconv_forward.1} parent=11 // pred_check_branch
        %186 = sbr.rel (%p184) target = $region16
      $region15: #{malconv_forward.1} parent=11 // pred_region
        _
      $region16: #{malconv_forward.1} parent=11 // pred_fallthru
        _
      // Predicated region
      $region17: #{malconv_forward.1} parent=11 // pred_check
        %p187 = pneg %p80
      $region18: #{malconv_forward.1} parent=11 // pred_check_branch
        %189 = sbr.rel (%p187) target = $region20
      $region19: #{malconv_forward.1} parent=11 // pred_region
        _
      $region20: #{malconv_forward.1} parent=11 // pred_fallthru
        _
      // Predicated region
      $region21: #{malconv_forward.1} parent=11 // pred_check
        %p190 = pneg %p101
      $region22: #{malconv_forward.1} parent=11 // pred_check_branch
        %192 = sbr.rel (%p190) target = $region24
      $region23: #{malconv_forward.1} parent=11 // pred_region
        _
      $region24: #{malconv_forward.1} parent=11 // pred_fallthru
        _
      // Predicated region
      $region25: #{malconv_forward.1} parent=11 // pred_check
        %p193 = pneg %p122
      $region26: #{malconv_forward.1} parent=11 // pred_check_branch
        %195 = sbr.rel (%p193) target = $region28
      $region27: #{malconv_forward.1} parent=11 // pred_region
        _
      $region28: #{malconv_forward.1} parent=11 // pred_fallthru
        _
      // Predicated region
      $region29: #{malconv_forward.1} parent=11 // pred_check
        %p196 = pneg %p143
      $region30: #{malconv_forward.1} parent=11 // pred_check_branch
        %198 = sbr.rel (%p196) target = $region32
      $region31: #{malconv_forward.1} parent=11 // pred_region
        _
      $region32: #{malconv_forward.1} parent=11 // pred_fallthru
        _
    $region12: #{malconv_forward.1} parent=5 // pred_fallthru
      _
    %p199 = scmp.lt.s32.totalorder %s12, 2
    // Predicated region
    $region33: #{malconv_forward.1} parent=5 // pred_check
      %p200 = pneg %p199
    $region34: #{malconv_forward.1} parent=5 // pred_check_branch
      %202 = sbr.rel (%p200) target = $region36
    $region35: #{malconv_forward.1} parent=5 // pred_region
      // Predicated region
      $region37: #{malconv_forward.1} parent=35 // pred_check
        %p203 = pneg %p32
      $region38: #{malconv_forward.1} parent=35 // pred_check_branch
        %205 = sbr.rel (%p203) target = $region40
      $region39: #{malconv_forward.1} parent=35 // pred_region
        %p206 = scmp.lt.s32.totalorder %s12, 1
        %s207 = scalar_select %p206, %s12, 1
        %s208 = smul.addr %s207, 2
        %s209 = smul.addr %s208, 8
        %s210 = scalar_lea.vmem %s0, %s209
      $region40: #{malconv_forward.1} parent=35 // pred_fallthru
        _
    $region36: #{malconv_forward.1} parent=5 // pred_fallthru
      _
    %p211 = scmp.le.s32.totalorder 1, %s12
    %p212 = scmp.lt.s32.totalorder %s12, 3
    %p213 = pnand %p211, %p212
    %p214 = pneg %p213
    // Predicated region
    $region41: #{malconv_forward.1} parent=5 // pred_check
      _
    $region42: #{malconv_forward.1} parent=5 // pred_check_branch
      %216 = sbr.rel (%p213) target = $region44
    $region43: #{malconv_forward.1} parent=5 // pred_region
      %s217 = ssub.s32 %s12, 1
      %p218 = scmp.lt.s32.totalorder %s17, 1
      %s219 = scalar_select %p218, %s17, 1
      %s220 = smul.addr %s219, 2
      %s221 = smul.addr %s220, 8
      %s222 = scalar_lea.vmem %s0, %s221
      %p223 = pneg %p38
      %p224 = pneg %p35
      %p225 = pneg %p59
      %p226 = pneg %p56
      %p227 = pneg %p80
      %p228 = pneg %p77
      %p229 = pneg %p101
      %p230 = pneg %p98
      %p231 = pneg %p122
      %p232 = pneg %p119
      %p233 = pneg %p143
      %p234 = pneg %p140
      %p235 = pneg %p169
      %p236 = pneg %p166
      %p237 = scmp.lt.s32.totalorder %s17, 1
      %s238 = scalar_select %p237, %s17, 1
      %s239 = smul.addr %s238, 8
      %s240 = scalar_lea.vmem %s6, %s239
      %p241 = scmp.lt.s32.totalorder %s17, 1
      %s242 = scalar_select %p241, %s17, 1
      %s243 = smul.addr %s242, 2
      %s244 = smul.addr %s243, 8
      %s245 = scalar_lea.vmem %s0, %s244
      %p246 = scmp.lt.s32.totalorder %s17, 1
      %s247 = scalar_select %p246, %s17, 1
      %s248 = smul.addr %s247, 8
      %s249 = scalar_lea.vmem %s6, %s248
      %v251 = vld [vmem:[%s245] sm:$0xff]
      %v252 = vld [vmem:[%s245 + $0x8] sm:$0xff]
      %vm255 = vcmask 1046528
      %v256 = vrot.slane %v251, 1
      %v257 = vrot.slane %v252, 1
      %v258 = vsel %vm255, %v256, %v257
      %v261 = vsel %vm255, %v257, %v256
      %263 = vrot.lane.b32.xlu0 %v258, 32
      %v264 = vpop.permute.xlu0 %263
      %265 = vrot.lane.b32.xlu0 %v261, 32
      %v266 = vpop.permute.xlu0 %265
      %vm269 = vcmask 261120
      %v270 = vsel %vm269, %v251, %v264
      %v271 = vsel %vm269, %v252, %v266
      %v272 = vpack.c.bf16 %v271, %v270
      %v273 = vld [vmem:[%s1] sm:$0xf]
      %v274 = vld [vmem:[%s1 + $0x4] sm:$0xf]
      %v275 = vld [vmem:[%s1 + $0x8] sm:$0xf]
      %v276 = vld [vmem:[%s1 + $0xc] sm:$0xf]
      %v277 = vld [vmem:[%s1 + $0x10] sm:$0xf]
      %v278 = vld [vmem:[%s1 + $0x14] sm:$0xf]
      %v279 = vld [vmem:[%s1 + $0x18] sm:$0xf]
      %v280 = vld [vmem:[%s1 + $0x1c] sm:$0xf]
      %v281 = vld [vmem:[%s4] sm:$0x1]
      %v282 = vperm.slane %v281, 0
      %v291 = vunpack.c.l.b16 %v273
      %v292 = vunpack.c.l.b16 %v274
      %v293 = vunpack.c.l.b16 %v275
      %v294 = vunpack.c.l.b16 %v276
      %v295 = vunpack.c.l.b16 %v277
      %v296 = vunpack.c.l.b16 %v278
      %v297 = vunpack.c.l.b16 %v279
      %v298 = vunpack.c.l.b16 %v280
      %v299 = vpack.c.b16 %v292, %v291
      %v300 = vpack.c.b16 %v294, %v293
      %v301 = vpack.c.b16 %v296, %v295
      %v302 = vpack.c.b16 %v298, %v297
      %vm307 = vcmask 523264
      %v309 = vsel %vm307, %v272, 0
      %311 = vmatpush.bf16.msra.mxu0 0
      %312 = vmatpush.bf16.msra.mxu0 0
      %313 = vmatpush.bf16.msra.mxu0 0
      %314 = vmatpush.bf16.msra.mxu0 0
      %315 = vmatpush.bf16.msra.mxu0 %v302
      %316 = vmatpush.bf16.msra.mxu0 %v301
      %317 = vmatpush.bf16.msra.mxu0 %v300
      %318 = vmatpush.bf16.msra.mxu0 %v299
      %319 = vmatmul.bf16.gmra.mxu0 %v309
      %v320 = vpop.f32.mrf.mxu0
      %v321 = vadd.f32 %v282, %v320
      %v322 = vpop.f32.mrf.mxu0
      %v323 = vadd.f32 %v282, %v322
      %324 = vdwg.mxu0
      %v325 = vmax.f32 %v321, 0.0
      %v326 = vmax.f32 %v323, 0.0
      %v327 = vxor.u32 %v321, 2147483648
      %v328 = vxor.u32 %v323, 2147483648
      %v329 = vmul.f32 %v327, 1.442695
      %v330 = vpow.pop %v329
      %v331 = vmul.f32 %v328, 1.442695
      %v332 = vpow.pop %v331
      %v333 = vadd.f32 %v330, 1.0
      %v334 = vadd.f32 %v332, 1.0
      %v335 = vrcp.pop %v333
      %v336 = vmul.f32 %v333, %v335
      %v337 = vsub.f32 1.0, %v336
      %v338 = vmul.f32 %v335, %v337
      %v339 = vadd.f32 %v335, %v338
      %vm340 = vweird.f32 %v333
      %vm341 = vweird.f32 %v335
      %vm342 = vmor %vm340, %vm341
      %v343 = vsel %vm342, %v335, %v339
      %v344 = vand.u32 2147483647, %v333
      %vm345 = vcmp.eq.f32.partialorder %v344, 8.507059e+37
      %v346 = vand.u32 %v333, 2147483648
      %v347 = vor.u32 1.1754944e-38, %v346
      %v348 = vsel %vm345, %v347, %v343
      %v349 = vmul.f32 1.0, %v348
      %v350 = vrcp.pop %v334
      %v351 = vmul.f32 %v334, %v350
      %v352 = vsub.f32 1.0, %v351
      %v353 = vmul.f32 %v350, %v352
      %v354 = vadd.f32 %v350, %v353
      %vm355 = vweird.f32 %v334
      %vm356 = vweird.f32 %v350
      %vm357 = vmor %vm355, %vm356
      %v358 = vsel %vm357, %v350, %v354
      %v359 = vand.u32 2147483647, %v334
      %vm360 = vcmp.eq.f32.partialorder %v359, 8.507059e+37
      %v361 = vand.u32 %v334, 2147483648
      %v362 = vor.u32 1.1754944e-38, %v361
      %v363 = vsel %vm360, %v362, %v358
      %v364 = vmul.f32 1.0, %v363
      %367 = vrot.lane.b32.xlu0 %v349, 96
      %v368 = vpop.permute.xlu0 %367
      %369 = vrot.lane.b32.xlu0 %v364, 96
      %v370 = vpop.permute.xlu0 %369
      %v373 = vmul.f32 %v325, %v368
      %v374 = vmul.f32 %v326, %v370
      %v375 = vld [vmem:[%s5] sm:$0xff]
      %v376 = vld [vmem:[%s5 + $0x8] sm:$0xff]
      %378 = vset.pattern.permute.xlu0 0
      %379 = vperm.xlu0 %378, %v375
      %v380 = vpop.permute.xlu0 %379
      %383 = vset.pattern.permute.xlu0 0
      %384 = vperm.xlu0 %383, %v376
      %v385 = vpop.permute.xlu0 %384
      %v387 = vmul.f32 %v373, %v380
      %v388 = vmul.f32 %v374, %v385
      %v389 = vsel %vm269, %v387, -inf
      %v390 = vsel %vm269, %v388, -inf
      %v391 = vmax.f32 %v389, %v390
      %v392 = vrot.slane %v391, 4
      %v393 = vmax.f32 %v391, %v392
      %v394 = vrot.slane %v393, 2
      %v395 = vmax.f32 %v393, %v394
      %v396 = vrot.slane %v395, 1
      %v397 = vmax.f32 %v395, %v396
      %v398 = vld [vmem:[%s2] sm:$0xff]
      %v399 = vld [vmem:[%s2 + $0x8] sm:$0xff]
      %v400 = vld [vmem:[%s2 + $0x10] sm:$0xff]
      %v401 = vld [vmem:[%s2 + $0x18] sm:$0xff]
      %v402 = vld [vmem:[%s4 + $0x1] sm:$0x1]
      %v403 = vperm.slane %v402, 0
      %v405 = vsel %vm269, %v397, 0
      %407 = vmatpush.msra.mxu0 0.0
      %408 = vmatpush.msra.mxu0 0.0
      %409 = vmatpush.msra.mxu0 0.0
      %410 = vmatpush.msra.mxu0 0.0
      %411 = vmatpush.msra.mxu0 0.0
      %412 = vmatpush.msra.mxu0 0.0
      %413 = vmatpush.msra.mxu0 0.0
      %414 = vmatpush.msra.mxu0 0.0
      %415 = vmatpush.msra.mxu0 0.0
      %416 = vmatpush.msra.mxu0 0.0
      %417 = vmatpush.msra.mxu0 0.0
      %418 = vmatpush.msra.mxu0 0.0
      %419 = vmatpush.msra.mxu0 %v401
      %420 = vmatpush.msra.mxu0 %v400
      %421 = vmatpush.msra.mxu0 %v399
      %422 = vmatpush.msra.mxu0 %v398
      %423 = vmatmul.f32.gmra.mxu0 %v405
      %v424 = vpop.f32.mrf.mxu0
      %v425 = vadd.f32 %v403, %v424
      %426 = vdwg.mxu0
      %v427 = vmax.f32 %v425, 0.0
      %v428 = vld [vmem:[%s3] sm:$0xff]
      %v429 = vld [vmem:[%s3 + $0x8] sm:$0xff]
      %v430 = vld [vmem:[%s3 + $0x10] sm:$0xff]
      %v431 = vld [vmem:[%s3 + $0x18] sm:$0xff]
      %v432 = vld [vmem:[%s3 + $0x20] sm:$0xff]
      %v433 = vld [vmem:[%s3 + $0x28] sm:$0xff]
      %v434 = vld [vmem:[%s3 + $0x30] sm:$0xff]
      %v435 = vld [vmem:[%s3 + $0x38] sm:$0xff]
      %v436 = vld [vmem:[%s3 + $0x40] sm:$0xff]
      %v437 = vld [vmem:[%s3 + $0x48] sm:$0xff]
      %v438 = vld [vmem:[%s3 + $0x50] sm:$0xff]
      %v439 = vld [vmem:[%s3 + $0x58] sm:$0xff]
      %v440 = vld [vmem:[%s3 + $0x60] sm:$0xff]
      %v441 = vld [vmem:[%s3 + $0x68] sm:$0xff]
      %v442 = vld [vmem:[%s3 + $0x70] sm:$0xff]
      %v443 = vld [vmem:[%s3 + $0x78] sm:$0xff]
      %v444 = vld [vmem:[%s4 + $0x2] sm:$0x1]
      %v445 = vperm.slane %v444, 0
      %446 = vmatpush.msra.mxu0 %v443
      %447 = vmatpush.msra.mxu0 %v442
      %448 = vmatpush.msra.mxu0 %v441
      %449 = vmatpush.msra.mxu0 %v440
      %450 = vmatpush.msra.mxu0 %v439
      %451 = vmatpush.msra.mxu0 %v438
      %452 = vmatpush.msra.mxu0 %v437
      %453 = vmatpush.msra.mxu0 %v436
      %454 = vmatpush.msra.mxu0 %v435
      %455 = vmatpush.msra.mxu0 %v434
      %456 = vmatpush.msra.mxu0 %v433
      %457 = vmatpush.msra.mxu0 %v432
      %458 = vmatpush.msra.mxu0 %v431
      %459 = vmatpush.msra.mxu0 %v430
      %460 = vmatpush.msra.mxu0 %v429
      %461 = vmatpush.msra.mxu0 %v428
      %462 = vmatmul.f32.gmra.mxu0 %v427
      %v463 = vpop.f32.mrf.mxu0
      %v464 = vadd.f32 %v445, %v463
      %465 = vdwg.mxu0
      %466 = vst [vmem:[%s249] sm:$0xff] %v464
      %p467 = scmp.lt.s32.totalorder %s17, 1
      %s468 = scalar_select %p467, %s17, 1
      %s469 = smul.addr %s468, 8
      %s470 = scalar_lea.vmem %s6, %s469
      // Predicated region
      $region45: #{malconv_forward.1} parent=43 // pred_check
        %p471 = pneg %p166
      $region46: #{malconv_forward.1} parent=43 // pred_check_branch
        %473 = sbr.rel (%p471) target = $region48
      $region47: #{malconv_forward.1} parent=43 // pred_region
        _
      $region48: #{malconv_forward.1} parent=43 // pred_fallthru
        _
    $region44: #{malconv_forward.1} parent=5 // pred_fallthru
      _
    %p474 = scmp.le.s32.totalorder 2, %s12
    // Predicated region
    $region49: #{malconv_forward.1} parent=5 // pred_check
      %p475 = pneg %p474
    $region50: #{malconv_forward.1} parent=5 // pred_check_branch
      %477 = sbr.rel (%p475) target = $region52
    $region51: #{malconv_forward.1} parent=5 // pred_region
      %s478 = ssub.s32 %s12, 2
      // Predicated region
      $region53: #{malconv_forward.1} parent=51 // pred_check
        %p479 = pneg %p172
      $region54: #{malconv_forward.1} parent=51 // pred_check_branch
        %481 = sbr.rel (%p479) target = $region56
      $region55: #{malconv_forward.1} parent=51 // pred_region
        %p482 = scmp.lt.s32.totalorder %s18, 1
        %s483 = scalar_select %p482, %s18, 1
        %s484 = smul.addr %s483, 8
        %s485 = scalar_lea.vmem %s6, %s484
      $region56: #{malconv_forward.1} parent=51 // pred_fallthru
        _
    $region52: #{malconv_forward.1} parent=5 // pred_fallthru
      _
  $region6: #{malconv_forward.1} parent=0 // loop_footer
    %s16 = sadd.s32 1, %s12
  $region7: #{malconv_forward.1} parent=0 // loop_footer_branch
    %11 = sbr.rel target = $region3
  $region8: #{malconv_forward.1} parent=0 // loop_exit
    _

</llo_original>
